<compile_context>
chip_gen: v6e
topology: v6e:2x2x1
jax: 0.10.0
libtpu: 0.0.40
codegen_flags: <defaults>
</compile_context>

<pallas_src>
import functools

import jax
import jax.numpy as jnp
from jax.experimental import pallas as pl
from jax.experimental.pallas import tpu as pltpu


def _causal_conv1d_kernel(*refs, n_halo, K, dilation, Lt, needed):
    # refs = (x_halo_0, ..., x_halo_{n_halo-1}, x_cur, w2, bias, out)
    #   x_halo_i / x_cur : (1, C_in, Lt)  time tiles of the *unpadded* input
    #   w2               : (C_out, K*C_in) im2col-folded weight
    #   bias             : (C_out, 1)
    #   out              : (1, C_out, Lt)
    *x_refs, w_ref, b_ref, o_ref = refs
    t = pl.program_id(1)

    # Assemble the halo'd input window covering input positions
    # [t*Lt - pad, (t+1)*Lt)  ->  (C_in, pad + Lt).  Halo pieces whose global
    # tile index would be negative (causal left padding) are zeroed.
    pieces = []
    for i in range(n_halo):
        if i == 0:
            # Oldest halo tile: only its trailing `needed` columns are required.
            blk = x_refs[0][0, :, pl.ds(Lt - needed, needed)]
        else:
            blk = x_refs[i][0]
        valid = t >= (n_halo - i)
        pieces.append(jnp.where(valid, blk, jnp.zeros_like(blk)))
    pieces.append(x_refs[n_halo][0])                              # current tile
    xh = pieces[0] if len(pieces) == 1 else jnp.concatenate(pieces, axis=-1)

    # im2col: stack the K dilated taps along the contraction axis (shift done
    # once while building the slab), then a single MXU matmul of depth K*C_in.
    taps = [xh[:, j * dilation: j * dilation + Lt] for j in range(K)]
    slab = taps[0] if K == 1 else jnp.concatenate(taps, axis=0)   # (K*C_in, Lt)

    acc = jnp.dot(w_ref[...], slab, preferred_element_type=jnp.float32)  # (C_out, Lt)
    acc = acc + b_ref[...]                                        # (C_out, 1) broadcast
    o_ref[0] = acc.astype(o_ref.dtype)


def _halo_index_map(b, t, *, back):
    # Previous tile (t - back); clamp at 0, the kernel zero-masks the clamped case.
    return (b, 0, jnp.maximum(t - back, 0))


def causal_conv1d(x, weight, bias, *, dilation=1, l_tile=512):
    """x: (B, C_in, L); weight: (C_out, C_in, K); bias: (C_out,) -> (B, C_out, L).

    Matches nn.Conv1d(padding=(K-1)*dilation, dilation=dilation) + Chomp1d.
    """
    B, C_in, L = x.shape
    C_out, _, K = weight.shape
    pad = (K - 1) * dilation

    # Time tile: lane-dense multiple of 128 when the sequence allows it,
    # otherwise the full (tiny) sequence.  Sized well under v7x's 64 MiB VMEM.
    if L >= 128:
        Lt = min(l_tile, -(-L // 128) * 128)
        Lt = max(128, (Lt // 128) * 128)
    else:
        Lt = L
    T = -(-L // Lt)                                    # number of output time tiles
    n_halo = (-(-pad // Lt)) if pad > 0 else 0         # left-halo tiles needed
    needed = pad - (n_halo - 1) * Lt if n_halo > 0 else 0

    # Fold the taps into the contraction dim: w2[o, j*C_in + c] = weight[o, c, j].
    w2 = jnp.transpose(weight, (0, 2, 1)).reshape(C_out, K * C_in)
    b_2d = bias.reshape(C_out, 1)

    kernel = functools.partial(_causal_conv1d_kernel, n_halo=n_halo, K=K,
                               dilation=dilation, Lt=Lt, needed=needed)

    x_specs = [pl.BlockSpec((1, C_in, Lt),
                            functools.partial(_halo_index_map, back=n_halo - i))
               for i in range(n_halo)]
    x_specs.append(pl.BlockSpec((1, C_in, Lt), lambda b, t: (b, 0, t)))

    flops = 2 * B * C_out * C_in * K * L
    bytes_accessed = int(((n_halo + 1) * x.size + w2.size + b_2d.size
                          + B * C_out * L) * x.dtype.itemsize)

    return pl.pallas_call(
        kernel,
        out_shape=jax.ShapeDtypeStruct((B, C_out, L), x.dtype),
        grid_spec=pltpu.PrefetchScalarGridSpec(
            num_scalar_prefetch=0,
            grid=(B, T),
            in_specs=x_specs + [
                pl.BlockSpec((C_out, K * C_in), lambda b, t: (0, 0)),
                pl.BlockSpec((C_out, 1), lambda b, t: (0, 0)),
            ],
            out_specs=pl.BlockSpec((1, C_out, Lt), lambda b, t: (b, 0, t)),
        ),
        compiler_params=pltpu.CompilerParams(
            dimension_semantics=("parallel", "parallel")),
        cost_estimate=pl.CostEstimate(flops=flops, transcendentals=0,
                                      bytes_accessed=bytes_accessed),
    )(*([x] * (n_halo + 1) + [w2, b_2d]))


def _reference(x, weight, bias, *, dilation):
    """Pure-JAX reference mirroring nn.Conv1d(padding=pad, dilation=d) + Chomp1d."""
    K = weight.shape[-1]
    pad = (K - 1) * dilation
    out = jax.lax.conv_general_dilated(
        x, weight,
        window_strides=(1,),
        padding=[(pad, pad)],
        rhs_dilation=(dilation,),
        dimension_numbers=("NCH", "OIH", "NCH"),
    )
    out = out + bias[None, :, None]
    return out[:, :, : x.shape[-1]]                    # Chomp1d((K-1)*dilation)


def _make_params(key, C_in, C_out, K):
    kw, kb = jax.random.split(key)
    # init_weights(): weight ~ N(0, 0.01)
    weight = 0.01 * jax.random.normal(kw, (C_out, C_in, K), dtype=jnp.float32)
    # bias keeps PyTorch default Conv1d init: U(-1/sqrt(fan_in), 1/sqrt(fan_in))
    bound = 1.0 / ((C_in * K) ** 0.5)
    bias = jax.random.uniform(kb, (C_out,), minval=-bound, maxval=bound,
                              dtype=jnp.float32)
    return weight, bias


if __name__ == "__main__":
    key = jax.random.PRNGKey(0)
    k1, k2, k3 = jax.random.split(key, 3)

    # Module config: CausalConv1d(in_channels=4, out_channels=8, kernel_size=3, dilation=2)
    B, C_in, C_out, K, dilation = 2, 4, 8, 3, 2

    # --- test 1: tiny sequence (single full-sequence tile) ---
    L = 16
    x = jax.random.normal(k1, (B, C_in, L), dtype=jnp.float32)
    weight, bias = _make_params(k2, C_in, C_out, K)
    out = jax.block_until_ready(causal_conv1d(x, weight, bias, dilation=dilation))
    ref = _reference(x, weight, bias, dilation=dilation)
    assert out.shape == (B, C_out, L), out.shape
    assert jnp.allclose(out, ref, atol=1e-5, rtol=1e-5), \
        float(jnp.max(jnp.abs(out - ref)))

    # --- test 2: lane-dense time tiling with a halo (L = 3 tiles of 128) ---
    L2 = 384
    x2 = jax.random.normal(k3, (B, C_in, L2), dtype=jnp.float32)
    out2 = jax.block_until_ready(
        causal_conv1d(x2, weight, bias, dilation=dilation, l_tile=128))
    ref2 = _reference(x2, weight, bias, dilation=dilation)
    assert out2.shape == (B, C_out, L2), out2.shape
    assert jnp.allclose(out2, ref2, atol=1e-5, rtol=1e-5), \
        float(jnp.max(jnp.abs(out2 - ref2)))

    print("KERNEL_OK")
</pallas_src>

<mosaic_0001>
module attributes {stable_mosaic.version = 11 : i64} {
  func.func @_causal_conv1d_kernel(%arg0: i32, %arg1: i32, %arg2: memref<1x4x16xf32, #tpu.memory_space<vmem>>, %arg3: memref<1x4x16xf32, #tpu.memory_space<vmem>>, %arg4: memref<8x12xf32, #tpu.memory_space<vmem>>, %arg5: memref<8x1xf32, #tpu.memory_space<vmem>>, %arg6: memref<1x8x16xf32, #tpu.memory_space<vmem>>) attributes {dimension_semantics = [#tpu.dimension_semantics<parallel>, #tpu.dimension_semantics<parallel>], iteration_bounds = array<i64: 2, 1>, scalar_prefetch = 0 : i64, scratch_operands = 0 : i64, tpu.core_type = #tpu.core_type<tc>, window_params = [{transform_indices = @transform_0, window_bounds = array<i64: 1, 4, 16>}, {transform_indices = @transform_1, window_bounds = array<i64: 1, 4, 16>}, {pipeline_mode = #tpu.pipeline_mode<synchronous>, transform_indices = @transform_2, window_bounds = array<i64: 8, 12>}, {pipeline_mode = #tpu.pipeline_mode<synchronous>, transform_indices = @transform_3, window_bounds = array<i64: 8, 1>}, {transform_indices = @transform_4, window_bounds = array<i64: 1, 8, 16>}]} {
    %c0 = arith.constant 0 : index
    %c0_0 = arith.constant 0 : index
    %c12 = arith.constant 12 : index
    %0 = vector.load %arg2[%c0, %c0_0, %c12] : memref<1x4x16xf32, #tpu.memory_space<vmem>>, vector<1x4x4xf32>
    %1 = vector.shape_cast %0 : vector<1x4x4xf32> to vector<4x4xf32>
    %c1_i32 = arith.constant 1 : i32
    %2 = arith.cmpi sge, %arg1, %c1_i32 : i32
    %cst = arith.constant 0.000000e+00 : f32
    %3 = vector.broadcast %cst : f32 to vector<4x4xf32>
    %4 = arith.select %2, %1, %3 : vector<4x4xf32>
    %c0_1 = arith.constant 0 : index
    %c0_2 = arith.constant 0 : index
    %c0_3 = arith.constant 0 : index
    %5 = vector.load %arg3[%c0_1, %c0_2, %c0_3] : memref<1x4x16xf32, #tpu.memory_space<vmem>>, vector<1x4x16xf32>
    %6 = vector.shape_cast %5 : vector<1x4x16xf32> to vector<4x16xf32>
    %7 = tpu.concatenate %4, %6 in 1 : vector<4x4xf32>, vector<4x16xf32> -> vector<4x20xf32>
    %8 = vector.extract_strided_slice %7 {offsets = [0, 0], sizes = [4, 16], strides = [1, 1]} : vector<4x20xf32> to vector<4x16xf32>
    %9 = vector.extract_strided_slice %7 {offsets = [0, 2], sizes = [4, 16], strides = [1, 1]} : vector<4x20xf32> to vector<4x16xf32>
    %10 = vector.extract_strided_slice %7 {offsets = [0, 4], sizes = [4, 16], strides = [1, 1]} : vector<4x20xf32> to vector<4x16xf32>
    %11 = tpu.concatenate %8, %9, %10 in 0 : vector<4x16xf32>, vector<4x16xf32>, vector<4x16xf32> -> vector<12x16xf32>
    %c0_4 = arith.constant 0 : index
    %c0_5 = arith.constant 0 : index
    %12 = vector.load %arg4[%c0_4, %c0_5] : memref<8x12xf32, #tpu.memory_space<vmem>>, vector<8x12xf32>
    %cst_6 = arith.constant dense<0.000000e+00> : vector<8x16xf32>
    %13 = tpu.matmul %12, %11, %cst_6 {dimension_numbers = #tpu.dot_dimension_numbers<[1], [0], [0], [1], [0, 0, 1, 1], [], []>} : vector<8x12xf32>, vector<12x16xf32>, vector<8x16xf32> -> vector<8x16xf32>
    %c0_7 = arith.constant 0 : index
    %c0_8 = arith.constant 0 : index
    %14 = vector.load %arg5[%c0_7, %c0_8] : memref<8x1xf32, #tpu.memory_space<vmem>>, vector<8x1xf32>
    %15 = vector.broadcast %14 : vector<8x1xf32> to vector<8x16xf32>
    %16 = arith.addf %13, %15 : vector<8x16xf32>
    %c0_9 = arith.constant 0 : index
    %c0_10 = arith.constant 0 : index
    %c0_11 = arith.constant 0 : index
    %17 = vector.load %arg6[%c0_9, %c0_10, %c0_11] : memref<1x8x16xf32, #tpu.memory_space<vmem>>, vector<1x8x16xf32>
    %18 = vector.shape_cast %17 : vector<1x8x16xf32> to vector<8x16xf32>
    %19 = vector.shape_cast %16 : vector<8x16xf32> to vector<1x8x16xf32>
    tpu.vector_store %arg6[%c0_9, %c0_10, %c0_11], %19 {strides = array<i32>} : memref<1x8x16xf32, #tpu.memory_space<vmem>>, vector<1x8x16xf32>,
    return
  }
  func.func @transform_0(%arg0: i32, %arg1: i32) -> (i32, i32, i32) {
    %c1_i32 = arith.constant 1 : i32
    %0 = arith.subi %arg1, %c1_i32 : i32
    %c0_i32 = arith.constant 0 : i32
    %1 = arith.maxsi %0, %c0_i32 : i32
    %c0_i32_0 = arith.constant 0 : i32
    %c0_i32_1 = arith.constant 0 : i32
    return %arg0, %c0_i32_0, %1 : i32, i32, i32
  }
  func.func @transform_1(%arg0: i32, %arg1: i32) -> (i32, i32, i32) {
    %c0_i32 = arith.constant 0 : i32
    %c0_i32_0 = arith.constant 0 : i32
    return %arg0, %c0_i32, %arg1 : i32, i32, i32
  }
  func.func @transform_2(%arg0: i32, %arg1: i32) -> (i32, i32) {
    %c0_i32 = arith.constant 0 : i32
    %c0_i32_0 = arith.constant 0 : i32
    %c0_i32_1 = arith.constant 0 : i32
    return %c0_i32, %c0_i32_0 : i32, i32
  }
  func.func @transform_3(%arg0: i32, %arg1: i32) -> (i32, i32) {
    %c0_i32 = arith.constant 0 : i32
    %c0_i32_0 = arith.constant 0 : i32
    %c0_i32_1 = arith.constant 0 : i32
    return %c0_i32, %c0_i32_0 : i32, i32
  }
  func.func @transform_4(%arg0: i32, %arg1: i32) -> (i32, i32, i32) {
    %c0_i32 = arith.constant 0 : i32
    %c0_i32_0 = arith.constant 0 : i32
    return %arg0, %c0_i32, %arg1 : i32, i32, i32
  }
}

</mosaic_0001>

<llo_original>
// kernel: tpu_custom_call.1
$region0: #{tpu_custom_call.1}
  #allocation0 [shape = 'u32[]', space=smem, size = 0x4, offset = 0x4, fixed_abs, tag = 'smem constant byte address 0x4 - core index']
  #allocation1 [shape = 'u32[144,128]{1,0:T(1,128)}', space=vmem, size = 0x12000, scoped, tag = 'internal scratch']
  %s0 = inlined_call_operand.vmem [shape: f32[2,4,16], index: 0, kind: input, shape index: {}]
  %s1 = inlined_call_operand.hbm [shape: f32[2,4,16], index: 1, kind: input, shape index: {}]
  %s2 = inlined_call_operand.hbm [shape: f32[8,12], index: 2, kind: input, shape index: {}]
  %s3 = inlined_call_operand.vmem [shape: f32[8,1], index: 3, kind: input, shape index: {}]
  %s4 = inlined_call_operand.hbm [shape: f32[2,8,16], index: 4, kind: output, shape index: {}]
  %s5 = sld [smem:[#allocation0]]
  $region57: #{tpu_custom_call.1} parent=0
    _
  %s7 = ssub.s32 1, %s5
  %s8 = scalar_select 0, %s7, %s5
  $region1: #{tpu_custom_call.1} parent=0
    #allocation2 [shape = 'u8[4096]{0}', space=vmem, size = 0x1000, scoped, tag = 'input window, operand 1']
    #allocation3 [shape = 's32[2]{0}', space=sflag, size = 0x8, scoped, tag = 'scoped memory for tpu_custom_call.1']
    #allocation4 [shape = 's32[2]{0}', space=sflag, size = 0x8, scoped, tag = 'scoped memory for tpu_custom_call.1']
    #allocation5 [shape = 'u8[4096]{0}', space=vmem, size = 0x1000, scoped, tag = 'input window, operand 2, single buffered']
    #allocation6 [shape = 's32[1]{0}', space=sflag, size = 0x4, scoped, tag = 'scoped memory for tpu_custom_call.1']
    #allocation7 [shape = 'u8[8192]{0}', space=vmem, size = 0x2000, scoped, tag = 'output window, operand 0']
    %9 = vsyncpa [#allocation3], 0
    %s10 = scalar_lea.sflag [#allocation3], 1
    %11 = vsyncpa %s10, 0
    %12 = vsyncpa [#allocation6], 0
    %13 = vsyncpa [#allocation4], 0
    %s14 = scalar_lea.sflag [#allocation4], 1
    %15 = vsyncpa %s14, 0
    loop: start=0, step=1, limit=4
    $region2: #{tpu_custom_call.1} parent=1 // loop_pre_header
      _
    $region3: #{tpu_custom_call.1} parent=1 // loop_header
      %s17 = sphi 0, %s21
      %p18 = scmp.ge.s32.totalorder %s17, 4
      %s24 = sphi 0, %s36
      %s25 = sphi 0, %s32
      %s26 = sphi 0, %s24
      %s27 = sphi 0, %s25
      %s28 = sphi 0, %s26
      %s29 = sphi 0, %s27
      %s47 = sphi 0, %s49
      %s50 = sphi 0, %s47
      %s51 = sphi 0, %s50
      %s67 = sphi 0, %s51
      %s75 = sphi 0, %s77
      %s78 = sphi 0, %s75
      %s79 = sphi 0, %s78
      %s95 = sphi 0, %s79
      %s99 = sphi 0, %s99
      %s101 = sphi 0, %s99
      %s102 = sphi 0, %s101
      %s116 = sphi 0, %s102
      %s120 = sphi 0, %s120
      %s122 = sphi 0, %s120
      %s123 = sphi 0, %s122
      %s137 = sphi 0, %s123
      %s145 = sphi 0, %s147
      %s148 = sphi 0, %s145
      %s149 = sphi 0, %s148
      %s165 = sphi 0, %s149
    $region4: #{tpu_custom_call.1} parent=1 // loop_header_branch
      %20 = sbr.rel (%p18) target = $region8
    $region5: #{tpu_custom_call.1} parent=1 // loop_body
      %s22 = ssub.s32 %s17, 1
      %s23 = ssub.s32 %s17, 2
      %s30 = sadd.s32 1, %s25
      %p31 = scmp.ge.s32.totalorder %s30, 1
      %s32 = scalar_select %p31, 0, %s30
      %s33 = sadd.s32 1, %s24
      %s34 = scalar_select %p31, %s33, %s24
      %p35 = scmp.ge.s32.totalorder %s34, 2
      %s36 = scalar_select %p35, 0, %s34
      %s37 = ssub.s32 %s25, 1
      %p38 = scmp.gt.s32.totalorder %s37, 0
      %s39 = scalar_select %p38, %s37, 0
      %s40 = ssub.s32 %s32, 1
      %p41 = scmp.gt.s32.totalorder %s40, 0
      %s42 = scalar_select %p41, %s40, 0
      %s43 = ssub.s32 %s24, %s36
      %s44 = ssub.s32 %s39, %s42
      %s45 = sor.u32 %s43, %s44
      %p46 = scmp.eq.s32.totalorder %s45, 0
      %s48 = sadd.s32 %s47, 1
      %s49 = scalar_select %p46, %s47, %s48
      %p52 = pneg %p46
      %p53 = scmp.eq.s32.totalorder %s17, 1
      %p54 = por %p52, %p53
      %p55 = scmp.ne.s32.totalorder %s47, %s50
      %p56 = scmp.eq.s32.totalorder %s17, 0
      %p57 = por %p55, %p56
      %p58 = scmp.ne.s32.totalorder %s47, %s50
      %p59 = scmp.eq.s32.totalorder %s22, 1
      %p60 = por %p58, %p59
      %p61 = scmp.ne.s32.totalorder %s50, %s51
      %p62 = scmp.eq.s32.totalorder %s22, 0
      %p63 = por %p61, %p62
      %p64 = scmp.ne.s32.totalorder %s50, %s51
      %p65 = scmp.eq.s32.totalorder %s23, 1
      %p66 = por %p64, %p65
      %p68 = scmp.ne.s32.totalorder %s51, %s67
      %p69 = scmp.eq.s32.totalorder %s23, 0
      %p70 = por %p68, %p69
      %s71 = ssub.s32 %s24, %s36
      %s72 = ssub.s32 %s25, %s32
      %s73 = sor.u32 %s71, %s72
      %p74 = scmp.eq.s32.totalorder %s73, 0
      %s76 = sadd.s32 %s75, 1
      %s77 = scalar_select %p74, %s75, %s76
      %p80 = pneg %p74
      %p81 = scmp.eq.s32.totalorder %s17, 1
      %p82 = por %p80, %p81
      %p83 = scmp.ne.s32.totalorder %s75, %s78
      %p84 = scmp.eq.s32.totalorder %s17, 0
      %p85 = por %p83, %p84
      %p86 = scmp.ne.s32.totalorder %s75, %s78
      %p87 = scmp.eq.s32.totalorder %s22, 1
      %p88 = por %p86, %p87
      %p89 = scmp.ne.s32.totalorder %s78, %s79
      %p90 = scmp.eq.s32.totalorder %s22, 0
      %p91 = por %p89, %p90
      %p92 = scmp.ne.s32.totalorder %s78, %s79
      %p93 = scmp.eq.s32.totalorder %s23, 1
      %p94 = por %p92, %p93
      %p96 = scmp.ne.s32.totalorder %s79, %s95
      %p97 = scmp.eq.s32.totalorder %s23, 0
      %p98 = por %p96, %p97
      %s100 = sadd.s32 %s99, 1
      %p103 = scmp.eq.s32.totalorder %s17, 1
      %p104 = scmp.ne.s32.totalorder %s99, %s101
      %p105 = scmp.eq.s32.totalorder %s17, 0
      %p106 = por %p104, %p105
      %p107 = scmp.ne.s32.totalorder %s99, %s101
      %p108 = scmp.eq.s32.totalorder %s22, 1
      %p109 = por %p107, %p108
      %p110 = scmp.ne.s32.totalorder %s101, %s102
      %p111 = scmp.eq.s32.totalorder %s22, 0
      %p112 = por %p110, %p111
      %p113 = scmp.ne.s32.totalorder %s101, %s102
      %p114 = scmp.eq.s32.totalorder %s23, 1
      %p115 = por %p113, %p114
      %p117 = scmp.ne.s32.totalorder %s102, %s116
      %p118 = scmp.eq.s32.totalorder %s23, 0
      %p119 = por %p117, %p118
      %s121 = sadd.s32 %s120, 1
      %p124 = scmp.eq.s32.totalorder %s17, 1
      %p125 = scmp.ne.s32.totalorder %s120, %s122
      %p126 = scmp.eq.s32.totalorder %s17, 0
      %p127 = por %p125, %p126
      %p128 = scmp.ne.s32.totalorder %s120, %s122
      %p129 = scmp.eq.s32.totalorder %s22, 1
      %p130 = por %p128, %p129
      %p131 = scmp.ne.s32.totalorder %s122, %s123
      %p132 = scmp.eq.s32.totalorder %s22, 0
      %p133 = por %p131, %p132
      %p134 = scmp.ne.s32.totalorder %s122, %s123
      %p135 = scmp.eq.s32.totalorder %s23, 1
      %p136 = por %p134, %p135
      %p138 = scmp.ne.s32.totalorder %s123, %s137
      %p139 = scmp.eq.s32.totalorder %s23, 0
      %p140 = por %p138, %p139
      %s141 = ssub.s32 %s24, %s36
      %s142 = ssub.s32 %s25, %s32
      %s143 = sor.u32 %s141, %s142
      %p144 = scmp.eq.s32.totalorder %s143, 0
      %s146 = sadd.s32 %s145, 1
      %s147 = scalar_select %p144, %s145, %s146
      %p150 = pneg %p144
      %p151 = scmp.eq.s32.totalorder %s17, 1
      %p152 = por %p150, %p151
      %p153 = scmp.ne.s32.totalorder %s145, %s148
      %p154 = scmp.eq.s32.totalorder %s17, 0
      %p155 = por %p153, %p154
      %p156 = scmp.ne.s32.totalorder %s145, %s148
      %p157 = scmp.eq.s32.totalorder %s22, 1
      %p158 = por %p156, %p157
      %p159 = scmp.ne.s32.totalorder %s148, %s149
      %p160 = scmp.eq.s32.totalorder %s22, 0
      %p161 = por %p159, %p160
      %p162 = scmp.ne.s32.totalorder %s148, %s149
      %p163 = scmp.eq.s32.totalorder %s23, 1
      %p164 = por %p162, %p163
      %p166 = scmp.ne.s32.totalorder %s149, %s165
      %p167 = scmp.eq.s32.totalorder %s23, 0
      %p168 = por %p166, %p167
      %p169 = scmp.le.s32.totalorder 1, %s17
      %p170 = scmp.lt.s32.totalorder %s17, 3
      %p171 = pnand %p169, %p170
      %p172 = pneg %p171
      // Predicated region
      $region9: #{tpu_custom_call.1} parent=5 // pred_check
        _
      $region10: #{tpu_custom_call.1} parent=5 // pred_check_branch
        %174 = sbr.rel (%p171) target = $region12
      $region11: #{tpu_custom_call.1} parent=5 // pred_region
        %s175 = ssub.s32 %s17, 1
        // Predicated region
        $region13: #{tpu_custom_call.1} parent=11 // pred_check
          %p176 = pneg %p112
        $region14: #{tpu_custom_call.1} parent=11 // pred_check_branch
          %178 = sbr.rel (%p176) target = $region16
        $region15: #{tpu_custom_call.1} parent=11 // pred_region
          %s180 = ssub.s32 128, 128
          %181 = vsyncadd [#allocation6], %s180
          %s183 = sshll.u32 [#allocation5], 4
          %s184 = int_to_ptr.vmem [resolvable:$true] %s183
          %186 = dma.hbm_to_vmem [thread:$0]  %s2, 128, %s184, [#allocation6]
        $region16: #{tpu_custom_call.1} parent=11 // pred_fallthru
          _
        // Predicated region
        $region17: #{tpu_custom_call.1} parent=11 // pred_check
          %p187 = pneg %p133
        $region18: #{tpu_custom_call.1} parent=11 // pred_check_branch
          %189 = sbr.rel (%p187) target = $region20
        $region19: #{tpu_custom_call.1} parent=11 // pred_region
          _
        $region20: #{tpu_custom_call.1} parent=11 // pred_fallthru
          _
      $region12: #{tpu_custom_call.1} parent=5 // pred_fallthru
        _
      %p190 = scmp.lt.s32.totalorder %s17, 2
      // Predicated region
      $region21: #{tpu_custom_call.1} parent=5 // pred_check
        %p191 = pneg %p190
      $region22: #{tpu_custom_call.1} parent=5 // pred_check_branch
        %193 = sbr.rel (%p191) target = $region24
      $region23: #{tpu_custom_call.1} parent=5 // pred_region
        // Predicated region
        $region25: #{tpu_custom_call.1} parent=23 // pred_check
          %p194 = pneg %p57
        $region26: #{tpu_custom_call.1} parent=23 // pred_check_branch
          %196 = sbr.rel (%p194) target = $region28
        $region27: #{tpu_custom_call.1} parent=23 // pred_region
          %s197 = ssub.s32 %s25, 1
          %p198 = scmp.gt.s32.totalorder %s197, 0
          %s199 = scalar_select %p198, %s197, 0
          %p200 = scmp.lt.s32.totalorder %s24, 1
          %s201 = scalar_select %p200, %s24, 1
          %p202 = scmp.lt.s32.totalorder %s199, 0
          %s203 = scalar_select %p202, %s199, 0
          %s204 = sadd.s32 %s203, %s201
          %s205 = smul.addr %s204, 4
          %s206 = scalar_lea.vmem %s0, %s205
          %s207 = ssub.s32 %s25, 1
          %p208 = scmp.gt.s32.totalorder %s207, 0
          %s209 = scalar_select %p208, %s207, 0
        $region28: #{tpu_custom_call.1} parent=23 // pred_fallthru
          _
        // Predicated region
        $region29: #{tpu_custom_call.1} parent=23 // pred_check
          %p210 = pneg %p85
        $region30: #{tpu_custom_call.1} parent=23 // pred_check_branch
          %212 = sbr.rel (%p210) target = $region32
        $region31: #{tpu_custom_call.1} parent=23 // pred_region
          %s213 = sand.u32 %s75, 1
          %s214 = scalar_lea.sflag [#allocation3], %s213
          %s215 = sand.u32 %s75, 1
          %s216 = smul.addr %s215, 4
          %s217 = scalar_lea.vmem [#allocation2], %s216
          %s219 = ssub.s32 64, 64
          %220 = vsyncadd %s214, %s219
          %s221 = sadd.s32 %s25, %s24
          %s222 = smul.addr %s221, 64
          %s223 = scalar_lea.hbm %s1, %s222
          %s225 = sshll.u32 %s217, 4
          %s226 = int_to_ptr.vmem [resolvable:$true] %s225
          %228 = dma.hbm_to_vmem [thread:$0]  %s223, 64, %s226, %s214
        $region32: #{tpu_custom_call.1} parent=23 // pred_fallthru
          _
      $region24: #{tpu_custom_call.1} parent=5 // pred_fallthru
        _
      %p229 = scmp.le.s32.totalorder 1, %s17
      %p230 = scmp.lt.s32.totalorder %s17, 3
      %p231 = pnand %p229, %p230
      %p232 = pneg %p231
      // Predicated region
      $region33: #{tpu_custom_call.1} parent=5 // pred_check
        _
      $region34: #{tpu_custom_call.1} parent=5 // pred_check_branch
        %234 = sbr.rel (%p231) target = $region36
      $region35: #{tpu_custom_call.1} parent=5 // pred_region
        %s235 = ssub.s32 %s17, 1
        %s236 = sand.u32 %s78, 1
        %s237 = scalar_lea.sflag [#allocation3], %s236
        %s238 = sand.u32 %s78, 1
        %s239 = smul.addr %s238, 4
        %s240 = scalar_lea.vmem [#allocation2], %s239
        // Predicated region
        $region37: #{tpu_custom_call.1} parent=35 // pred_check
          %p241 = pneg %p91
        $region38: #{tpu_custom_call.1} parent=35 // pred_check_branch
          %243 = sbr.rel (%p241) target = $region40
        $region39: #{tpu_custom_call.1} parent=35 // pred_region
          %244 = dma.done %s237, 64
        $region40: #{tpu_custom_call.1} parent=35 // pred_fallthru
          _
        // Predicated region
        $region41: #{tpu_custom_call.1} parent=35 // pred_check
          %p245 = pneg %p112
        $region42: #{tpu_custom_call.1} parent=35 // pred_check_branch
          %247 = sbr.rel (%p245) target = $region44
        $region43: #{tpu_custom_call.1} parent=35 // pred_region
          %248 = dma.done [#allocation6], 128
        $region44: #{tpu_custom_call.1} parent=35 // pred_fallthru
          _
        %s249 = ssub.s32 %s27, 1
        %p250 = scmp.gt.s32.totalorder %s249, 0
        %s251 = scalar_select %p250, %s249, 0
        %p252 = scmp.lt.s32.totalorder %s26, 1
        %s253 = scalar_select %p252, %s26, 1
        %p254 = scmp.lt.s32.totalorder %s251, 0
        %s255 = scalar_select %p254, %s251, 0
        %s256 = sadd.s32 %s255, %s253
        %s257 = smul.addr %s256, 4
        %s258 = scalar_lea.vmem %s0, %s257
        %p259 = pneg %p63
        %p260 = pneg %p60
        %s261 = sand.u32 %s78, 1
        %s262 = scalar_lea.sflag [#allocation3], %s261
        %s263 = sand.u32 %s78, 1
        %s264 = smul.addr %s263, 4
        %s265 = scalar_lea.vmem [#allocation2], %s264
        %p266 = pneg %p91
        %p267 = pneg %p88
        %p268 = pneg %p112
        %p269 = pneg %p109
        %p270 = pneg %p133
        %p271 = pneg %p130
        %p272 = pneg %p161
        %p273 = pneg %p158
        %s274 = sand.u32 %s148, 1
        %s275 = scalar_lea.sflag [#allocation4], %s274
        %s276 = sand.u32 %s148, 1
        %s277 = smul.addr %s276, 8
        %s278 = scalar_lea.vmem [#allocation7], %s277
        %s279 = ssub.s32 %s27, 1
        %p280 = scmp.gt.s32.totalorder %s279, 0
        %s281 = scalar_select %p280, %s279, 0
        %p282 = scmp.lt.s32.totalorder %s26, 1
        %s283 = scalar_select %p282, %s26, 1
        %p284 = scmp.lt.s32.totalorder %s281, 0
        %s285 = scalar_select %p284, %s281, 0
        %s286 = sadd.s32 %s285, %s283
        %s287 = smul.addr %s286, 4
        %s288 = scalar_lea.vmem %s0, %s287
        %s289 = ssub.s32 %s27, 1
        %p290 = scmp.gt.s32.totalorder %s289, 0
        %s291 = scalar_select %p290, %s289, 0
        %v292 = vld [vmem:[%s288] sm:$0xf]
        %p293 = scmp.ge.s32.totalorder %s27, 1
        %s294 = scalar_select %p293, 1, 0
        %v295 = vstv %s294
        %vm296 = vcmp.eq.s32.totalorder %v295, 1
        %v297 = vsel %vm296, %v292, 0.0
        %v298 = vld [vmem:[%s240] sm:$0xf]
        %300 = vrot.lane.b32.xlu0 %v297, 116
        %v301 = vpop.permute.xlu0 %300
        %304 = vrot.lane.b32.xlu0 %v298, 4
        %v305 = vpop.permute.xlu0 %304
        %vm307 = vcmask 31744
        %v308 = vsel %vm307, %v301, %v305
        %v310 = vrot.slane %v308, 4
        %311 = vrot.lane.b32.xlu0 %v310, 126
        %v312 = vpop.permute.xlu0 %311
        %314 = vrot.lane.b32.xlu0 %v308, 124
        %v315 = vpop.permute.xlu0 %314
        %vm316 = vcmask 1043456
        %v317 = vsel %vm316, %v308, %v312
        %v318 = vld [vmem:[#allocation5] sm:$0xff]
        %v319 = vld [vmem:[%s3] sm:$0xff]
        %321 = vset.pattern.permute.xlu0 0
        %322 = vperm.xlu0 %321, %v319
        %v323 = vpop.permute.xlu0 %322
        %vm325 = vcmask 97280
        %v327 = vsel %vm325, %v318, 0
        %v329 = vsel %vm316, %v315, 0
        %331 = vmatprep.subr.mxu0 0.0
        %332 = vmatpush1.msra.mxu0 0.0
        %333 = vmatprep.subr.mxu0 0.0
        %334 = vmatpush1.msra.mxu0 0.0
        %335 = vmatprep.subr.mxu0 0.0
        %336 = vmatpush1.msra.mxu0 0.0
        %337 = vmatprep.subr.mxu0 0.0
        %338 = vmatpush1.msra.mxu0 0.0
        %339 = vmatprep.subr.mxu0 0.0
        %340 = vmatpush1.msra.mxu0 0.0
        %341 = vmatprep.subr.mxu0 0.0
        %342 = vmatpush1.msra.mxu0 0.0
        %343 = vmatprep.subr.mxu0 0.0
        %344 = vmatpush1.msra.mxu0 0.0
        %345 = vmatprep.subr.mxu0 0.0
        %346 = vmatpush1.msra.mxu0 0.0
        %347 = vmatprep.subr.mxu0 0.0
        %348 = vmatpush1.msra.mxu0 0.0
        %349 = vmatprep.subr.mxu0 0.0
        %350 = vmatpush1.msra.mxu0 0.0
        %351 = vmatprep.subr.mxu0 0.0
        %352 = vmatpush1.msra.mxu0 0.0
        %353 = vmatprep.subr.mxu0 0.0
        %354 = vmatpush1.msra.mxu0 0.0
        %355 = vmatprep.subr.mxu0 0.0
        %356 = vmatpush1.msra.mxu0 0.0
        %357 = vmatprep.subr.mxu0 0.0
        %358 = vmatpush1.msra.mxu0 0.0
        %359 = vmatprep.subr.mxu0 0.0
        %360 = vmatpush1.msra.mxu0 %v329
        %361 = vmatprep.subr.mxu0 0.0
        %362 = vmatpush1.msra.mxu0 %v317
        %363 = vmatprep.subr.mxu0 0.0
        %364 = vmatpush2.msra.mxu0 0.0
        %365 = vmatprep.subr.mxu0 0.0
        %366 = vmatpush2.msra.mxu0 0.0
        %367 = vmatprep.subr.mxu0 0.0
        %368 = vmatpush2.msra.mxu0 0.0
        %369 = vmatprep.subr.mxu0 0.0
        %370 = vmatpush2.msra.mxu0 0.0
        %371 = vmatprep.subr.mxu0 0.0
        %372 = vmatpush2.msra.mxu0 0.0
        %373 = vmatprep.subr.mxu0 0.0
        %374 = vmatpush2.msra.mxu0 0.0
        %375 = vmatprep.subr.mxu0 0.0
        %376 = vmatpush2.msra.mxu0 0.0
        %377 = vmatprep.subr.mxu0 0.0
        %378 = vmatpush2.msra.mxu0 0.0
        %379 = vmatprep.subr.mxu0 0.0
        %380 = vmatpush2.msra.mxu0 0.0
        %381 = vmatprep.subr.mxu0 0.0
        %382 = vmatpush2.msra.mxu0 0.0
        %383 = vmatprep.subr.mxu0 0.0
        %384 = vmatpush2.msra.mxu0 0.0
        %385 = vmatprep.subr.mxu0 0.0
        %386 = vmatpush2.msra.mxu0 0.0
        %387 = vmatprep.subr.mxu0 0.0
        %388 = vmatpush2.msra.mxu0 0.0
        %389 = vmatprep.subr.mxu0 0.0
        %390 = vmatpush2.msra.mxu0 0.0
        %391 = vmatprep.subr.mxu0 0.0
        %392 = vmatpush2.msra.mxu0 0.0
        %393 = vmatprep.subr.mxu0 0.0
        %394 = vmatpush2.msra.mxu0 0.0
        %395 = vmatprep.mubr.f32.mxu0 0.0
        %396 = vmatmul.mubr.f32.gmra.mxu0 %v327
        %v397 = vpop.f32.mrf.mxu0
        %v398 = vadd.f32 %v323, %v397
        %v399 = vpop.f32.mrf.mxu0
        %400 = vdwg.mxu0
        %vm401 = vcmask 130048
        %402 = vst.msk [vmem:[%s278] sm:$0xff] %vm401, %v398
        %s403 = sand.u32 %s148, 1
        %s404 = scalar_lea.sflag [#allocation4], %s403
        %s405 = sand.u32 %s148, 1
        %s406 = smul.addr %s405, 8
        %s407 = scalar_lea.vmem [#allocation7], %s406
        // Predicated region
        $region45: #{tpu_custom_call.1} parent=35 // pred_check
          %p408 = pneg %p158
        $region46: #{tpu_custom_call.1} parent=35 // pred_check_branch
          %410 = sbr.rel (%p408) target = $region48
        $region47: #{tpu_custom_call.1} parent=35 // pred_region
          %s412 = ssub.s32 128, 128
          %413 = vsyncadd %s404, %s412
          %s414 = sadd.s32 %s27, %s26
          %s415 = smul.addr %s414, 128
          %s416 = scalar_lea.hbm %s4, %s415
          %s418 = sshll.u32 %s407, 4
          %s419 = int_to_ptr.vmem [resolvable:$true] %s418
          %421 = dma.vmem_to_hbm [thread:$0]  %s419, 128, %s416, %s404
        $region48: #{tpu_custom_call.1} parent=35 // pred_fallthru
          _
      $region36: #{tpu_custom_call.1} parent=5 // pred_fallthru
        _
      %p422 = scmp.le.s32.totalorder 2, %s17
      // Predicated region
      $region49: #{tpu_custom_call.1} parent=5 // pred_check
        %p423 = pneg %p422
      $region50: #{tpu_custom_call.1} parent=5 // pred_check_branch
        %425 = sbr.rel (%p423) target = $region52
      $region51: #{tpu_custom_call.1} parent=5 // pred_region
        %s426 = ssub.s32 %s17, 2
        // Predicated region
        $region53: #{tpu_custom_call.1} parent=51 // pred_check
          %p427 = pneg %p164
        $region54: #{tpu_custom_call.1} parent=51 // pred_check_branch
          %429 = sbr.rel (%p427) target = $region56
        $region55: #{tpu_custom_call.1} parent=51 // pred_region
          %s430 = sand.u32 %s149, 1
          %s431 = scalar_lea.sflag [#allocation4], %s430
          %s432 = sand.u32 %s149, 1
          %s433 = smul.addr %s432, 8
          %s434 = scalar_lea.vmem [#allocation7], %s433
          %435 = dma.done %s431, 128
        $region56: #{tpu_custom_call.1} parent=51 // pred_fallthru
          _
      $region52: #{tpu_custom_call.1} parent=5 // pred_fallthru
        _
    $region6: #{tpu_custom_call.1} parent=1 // loop_footer
      %s21 = sadd.s32 1, %s17
    $region7: #{tpu_custom_call.1} parent=1 // loop_footer_branch
      %16 = sbr.rel target = $region3
    $region8: #{tpu_custom_call.1} parent=1 // loop_exit
      _
    %436 = vsyncpa [#allocation3], 1
    %s437 = scalar_lea.sflag [#allocation3], 1
    %438 = vsyncpa %s437, 1
    %439 = vsyncpa [#allocation6], 1
    %440 = vsyncpa [#allocation4], 1
    %s441 = scalar_lea.sflag [#allocation4], 1
    %442 = vsyncpa %s441, 1

</llo_original>
